<compile_context>
chip_gen: v5e
topology: v5e:2x2
jax: 0.10.0
libtpu: 0.0.40
codegen_flags: <defaults>
</compile_context>

<pallas_src>
import jax
import jax.numpy as jnp
from jax.experimental import pallas as pl
from jax.experimental.pallas import tpu as pltpu


def _disc_kernel(hc_ref, hp_ref, hn1_ref, hn2_ref, wT_ref, b_ref, out_ref):
    """One (batch, node-tile) grid step.

    hc_ref  : (1, nc,  H2)  nc  in {1, tile_n}   summary / context vectors
    hp_ref  : (1, np,  H1)  np  in {1, tile_n}   positive vectors
    hn1_ref : (1, nn1, H1)  nn1 in {1, tile_n}   negative vectors (streamed)
    hn2_ref : (1, nn2, H1)                        negative vectors (streamed)
    wT_ref  : (H2, H1) grid-resident              bilinear weight, pre-transposed
    b_ref   : (1, 1) f32 in SMEM                  bilinear bias
    out_ref : (1, 3, tile_n) f32                  row 0 = sc_p, 1 = sc_n1, 2 = sc_n2
    All big operands stay in their arrival dtype; accumulation is f32.
    """
    tile_n = out_ref.shape[2]

    # Shared bilinear projection: t[r, i] = sum_j hc[r, j] * W[0, i, j].
    t = jax.lax.dot_general(hc_ref[0], wT_ref[...], (((1,), (0,)), ((), ())),
                            preferred_element_type=jnp.float32)      # (nc, H1) f32

    def score(x_ref):
        x = x_ref[0]                          # (nx, H1) native dtype -- no upcast
        nx, nc = x.shape[0], t.shape[0]
        t_x = t.astype(x.dtype)               # tiny; keeps MXU in native input dtype
        if nc == 1 and nx == 1:
            # One score for the whole batch row: tiny VPU dot, lane-broadcast.
            s = jnp.sum(x.astype(jnp.float32) * t, axis=-1, keepdims=True)
            return jnp.broadcast_to(s, (1, tile_n))
        if nc == 1:
            lhs, rhs = t_x, x                 # score[n] = <t, x[n, :]>
        elif nx == 1:
            lhs, rhs = x, t_x                 # score[n] = <x, t[n, :]>
        else:                                 # both per-node: row-sums of x*t
            lhs, rhs = jnp.ones((1, x.shape[1]), x.dtype), x * t_x
        # (1, H1) . (n, H1)^T -> (1, n): lane-major result, f32 accumulate on MXU.
        return jax.lax.dot_general(lhs, rhs, (((1,), (1,)), ((), ())),
                                   preferred_element_type=jnp.float32)

    bias = b_ref[0, 0]
    # Three direct lane-dense slab stores (one sublane row each).
    out_ref[0, 0:1, :] = score(hp_ref) + bias
    out_ref[0, 1:2, :] = score(hn1_ref) + bias
    out_ref[0, 2:3, :] = score(hn2_ref) + bias


def _vmem_budget():
    """(streaming budget bytes, vmem_limit_bytes) sized to the chip generation."""
    cap = 64 << 20
    try:
        info = pltpu.get_tpu_info()
        cap = int(getattr(info, "vmem_capacity_bytes", cap) or cap)
    except Exception:
        pass
    if cap >= (96 << 20):
        # v5e / v6e: 128 MiB physical VMEM -> big tiles, raised scoped limit.
        return 32 << 20, 64 << 20
    # v7x-class: 64 MiB physical / 32 MiB scoped default -> stay inside default.
    return 18 << 20, None


def _choose_tiling(N, H, itemsize, n_streamed, B):
    """Pick (N_pad, tile_n, vmem_limit): lane-aligned node tiles whose
    double-buffered streaming footprint fits the per-generation VMEM budget."""
    budget, vmem_limit = _vmem_budget()
    per_node_bytes = max(1, n_streamed) * 2 * H * itemsize    # x2: double buffer
    max_tile = max(128, (budget // per_node_bytes) // 128 * 128)

    if N <= 128:
        return N, N, vmem_limit                    # full-extent block, always tiny
    if N % 128 != 0:
        if N * per_node_bytes <= budget:
            return N, N, vmem_limit                # full-extent block still fits
        N_pad = pl.cdiv(N, 128) * 128              # pad so tiling stays 128-aligned
    else:
        N_pad = N

    tile = min(N_pad, max_tile)
    while tile > 128 and N_pad % tile != 0:        # largest 128-multiple divisor
        tile -= 128

    # v7x megacore: guarantee >= 2 grid steps on a parallel axis for small B.
    if B == 1 and N_pad // tile == 1 and N_pad % 256 == 0:
        tile = N_pad // 2
    return N_pad, tile, vmem_limit


def discriminator_forward(h_c, h_ori, h_p, h_n1, h_n2, W, bias):
    """Pallas implementation of Discriminator.forward.

    h_c, h_p, h_n1, h_n2 : (B, 1, H) or (B, N, H)  (torch expand_as == broadcast)
    h_ori                : (B, N, H)               (only supplies the node extent)
    W : (1, H1, H2) bilinear weight,  bias : (1,)
    Returns logits : (B, 3*N) float32.
    """
    B, N, H1 = h_ori.shape
    H2 = W.shape[2]
    assert W.shape == (1, H1, H2) and bias.shape == (1,)

    per_node = []
    for x, h in ((h_c, H2), (h_p, H1), (h_n1, H1), (h_n2, H1)):
        assert x.shape[0] == B and x.shape[2] == h and x.shape[1] in (1, N)
        per_node.append(x.shape[1] == N)

    n_streamed = sum(per_node)
    itemsize = max(jnp.dtype(x.dtype).itemsize for x in (h_c, h_p, h_n1, h_n2))
    N_pad, tile_n, vmem_limit = _choose_tiling(N, max(H1, H2), itemsize,
                                               n_streamed, B)
    n_tiles = N_pad // tile_n

    def prep(x, is_per_node):
        # Inputs pass through in their NATIVE dtype (no extra HBM convert pass);
        # only pad per-node tensors when the node axis had to be 128-aligned.
        if is_per_node and N_pad != N:
            x = jnp.pad(x, ((0, 0), (0, N_pad - N), (0, 0)))
        return x

    hc, hp, hn1, hn2 = (prep(x, p) for x, p in
                        zip((h_c, h_p, h_n1, h_n2), per_node))

    wT = jnp.transpose(W[0]).astype(h_c.dtype)      # (H2, H1), grid-resident
    b2 = bias.reshape(1, 1).astype(jnp.float32)     # SMEM scalar

    def spec(h, is_per_node):
        if is_per_node:
            return pl.BlockSpec((1, tile_n, h), lambda b, n: (b, n, 0))
        return pl.BlockSpec((1, 1, h), lambda b, n: (b, 0, 0))

    out = pl.pallas_call(
        _disc_kernel,
        out_shape=jax.ShapeDtypeStruct((B, 3, N_pad), jnp.float32),
        grid_spec=pltpu.PrefetchScalarGridSpec(
            num_scalar_prefetch=0,
            grid=(B, n_tiles),
            in_specs=[
                spec(H2, per_node[0]),                         # h_c
                spec(H1, per_node[1]),                         # h_p
                spec(H1, per_node[2]),                         # h_n1
                spec(H1, per_node[3]),                         # h_n2
                pl.BlockSpec((H2, H1), lambda b, n: (0, 0)),   # W^T (resident)
                pl.BlockSpec(memory_space=pltpu.SMEM),         # bias scalar
            ],
            out_specs=pl.BlockSpec((1, 3, tile_n), lambda b, n: (b, 0, n)),
        ),
        compiler_params=pltpu.CompilerParams(
            dimension_semantics=("parallel", "parallel"),
            vmem_limit_bytes=vmem_limit),
    )(hc, hp, hn1, hn2, wT, b2)

    if N_pad != N:
        out = out[:, :, :N]
    # (B, 3, N) -> (B, 3N): matches torch.cat((sc_p, sc_n1, sc_n2), dim=1);
    # row-major reshape, no transpose / extra HBM pass.
    return out.reshape(B, 3 * N)


def _reference(h_c, h_ori, h_p, h_n1, h_n2, W, bias):
    B, N, H1 = h_ori.shape
    H2 = W.shape[2]
    hc = jnp.broadcast_to(h_c, (B, N, H2)).astype(jnp.float32)
    hp = jnp.broadcast_to(h_p, (B, N, H1)).astype(jnp.float32)
    hn1 = jnp.broadcast_to(h_n1, (B, N, H1)).astype(jnp.float32)
    hn2 = jnp.broadcast_to(h_n2, (B, N, H1)).astype(jnp.float32)
    W0 = W[0].astype(jnp.float32)

    def score(x1, x2):
        return jnp.einsum("bni,ij,bnj->bn", x1, W0, x2) + bias[0]

    return jnp.concatenate([score(hp, hc), score(hn1, hc), score(hn2, hc)], axis=1)


if __name__ == "__main__":
    # Small shapes implied by the forward: batch=2, nodes=8, hidden n_h1=n_h2=32.
    B, N, H = 2, 8, 32
    key = jax.random.PRNGKey(0)
    k1, k2, k3, k4, k5, kw = jax.random.split(key, 6)

    h_ori = jax.random.normal(k1, (B, N, H), dtype=jnp.float32)
    h_c = jax.random.normal(k2, (B, 1, H), dtype=jnp.float32)    # summary, expand_as
    h_p = jax.random.normal(k3, (B, 1, H), dtype=jnp.float32)    # positive, expand_as
    h_n1 = jax.random.normal(k4, (B, N, H), dtype=jnp.float32)   # negatives
    h_n2 = jax.random.normal(k5, (B, N, H), dtype=jnp.float32)

    # nn.Bilinear(n_h1, n_h2, 1): weight (1, H, H) xavier_uniform, bias (1,) zeros.
    bound = (6.0 / (H + H)) ** 0.5
    W = jax.random.uniform(kw, (1, H, H), dtype=jnp.float32,
                           minval=-bound, maxval=bound)
    bias = jnp.zeros((1,), dtype=jnp.float32)

    logits = jax.jit(discriminator_forward)(h_c, h_ori, h_p, h_n1, h_n2, W, bias)
    jax.block_until_ready(logits)

    ref = _reference(h_c, h_ori, h_p, h_n1, h_n2, W, bias)
    assert logits.shape == (B, 3 * N), logits.shape
    assert jnp.allclose(logits, ref, atol=1e-3, rtol=1e-3), "mismatch vs reference"
    print("KERNEL_OK")
</pallas_src>

<mosaic_0001>
module attributes {stable_mosaic.version = 11 : i64} {
  func.func @_disc_kernel(%arg0: i32, %arg1: i32, %arg2: memref<1x1x32xf32, #tpu.memory_space<vmem>>, %arg3: memref<1x1x32xf32, #tpu.memory_space<vmem>>, %arg4: memref<1x8x32xf32, #tpu.memory_space<vmem>>, %arg5: memref<1x8x32xf32, #tpu.memory_space<vmem>>, %arg6: memref<32x32xf32, #tpu.memory_space<vmem>>, %arg7: memref<1x1xf32, #tpu.memory_space<smem>>, %arg8: memref<1x3x8xf32, #tpu.memory_space<vmem>>) attributes {dimension_semantics = [#tpu.dimension_semantics<parallel>, #tpu.dimension_semantics<parallel>], iteration_bounds = array<i64: 2, 1>, scalar_prefetch = 0 : i64, scratch_operands = 0 : i64, tpu.core_type = #tpu.core_type<tc>, window_params = [{transform_indices = @transform_0, window_bounds = array<i64: 1, 1, 32>}, {transform_indices = @transform_1, window_bounds = array<i64: 1, 1, 32>}, {transform_indices = @transform_2, window_bounds = array<i64: 1, 8, 32>}, {transform_indices = @transform_3, window_bounds = array<i64: 1, 8, 32>}, {pipeline_mode = #tpu.pipeline_mode<synchronous>, transform_indices = @transform_4, window_bounds = array<i64: 32, 32>}, {transform_indices = @transform_5, window_bounds = array<i64: 1, 1>}, {transform_indices = @transform_6, window_bounds = array<i64: 1, 3, 8>}]} {
    %c0 = arith.constant 0 : index
    %c0_0 = arith.constant 0 : index
    %c0_1 = arith.constant 0 : index
    %0 = vector.load %arg2[%c0, %c0_0, %c0_1] : memref<1x1x32xf32, #tpu.memory_space<vmem>>, vector<1x1x32xf32>
    %1 = vector.shape_cast %0 : vector<1x1x32xf32> to vector<1x32xf32>
    %c0_2 = arith.constant 0 : index
    %c0_3 = arith.constant 0 : index
    %2 = vector.load %arg6[%c0_2, %c0_3] : memref<32x32xf32, #tpu.memory_space<vmem>>, vector<32x32xf32>
    %cst = arith.constant dense<0.000000e+00> : vector<1x32xf32>
    %3 = tpu.matmul %1, %2, %cst {dimension_numbers = #tpu.dot_dimension_numbers<[1], [0], [0], [1], [0, 0, 1, 1], [], []>} : vector<1x32xf32>, vector<32x32xf32>, vector<1x32xf32> -> vector<1x32xf32>
    %c0_4 = arith.constant 0 : index
    %c0_5 = arith.constant 0 : index
    %4 = memref.load %arg7[%c0_4, %c0_5] : memref<1x1xf32, #tpu.memory_space<smem>>
    %c0_6 = arith.constant 0 : index
    %c0_7 = arith.constant 0 : index
    %c0_8 = arith.constant 0 : index
    %5 = vector.load %arg3[%c0_6, %c0_7, %c0_8] : memref<1x1x32xf32, #tpu.memory_space<vmem>>, vector<1x1x32xf32>
    %6 = vector.shape_cast %5 : vector<1x1x32xf32> to vector<1x32xf32>
    %7 = arith.mulf %6, %3 : vector<1x32xf32>
    %cst_9 = arith.constant dense<0.000000e+00> : vector<1xf32>
    %8 = vector.multi_reduction <add>, %7, %cst_9 [1] : vector<1x32xf32> to vector<1xf32>
    %9 = vector.shape_cast %8 : vector<1xf32> to vector<1x1xf32>
    %10 = vector.shape_cast %9 : vector<1x1xf32> to vector<1x1xf32>
    %11 = vector.broadcast %10 : vector<1x1xf32> to vector<1x8xf32>
    %12 = vector.broadcast %4 : f32 to vector<1x8xf32>
    %13 = arith.addf %11, %12 : vector<1x8xf32>
    %c0_10 = arith.constant 0 : index
    %c0_11 = arith.constant 0 : index
    %c0_12 = arith.constant 0 : index
    %14 = vector.load %arg8[%c0_10, %c0_11, %c0_12] : memref<1x3x8xf32, #tpu.memory_space<vmem>>, vector<1x1x8xf32>
    %15 = vector.shape_cast %14 : vector<1x1x8xf32> to vector<1x8xf32>
    %16 = vector.shape_cast %13 : vector<1x8xf32> to vector<1x1x8xf32>
    tpu.vector_store %arg8[%c0_10, %c0_11, %c0_12], %16 {strides = array<i32>} : memref<1x3x8xf32, #tpu.memory_space<vmem>>, vector<1x1x8xf32>,
    %c0_13 = arith.constant 0 : index
    %c0_14 = arith.constant 0 : index
    %c0_15 = arith.constant 0 : index
    %17 = vector.load %arg4[%c0_13, %c0_14, %c0_15] : memref<1x8x32xf32, #tpu.memory_space<vmem>>, vector<1x8x32xf32>
    %18 = vector.shape_cast %17 : vector<1x8x32xf32> to vector<8x32xf32>
    %cst_16 = arith.constant dense<0.000000e+00> : vector<1x8xf32>
    %19 = tpu.matmul %3, %18, %cst_16 {dimension_numbers = #tpu.dot_dimension_numbers<[1], [1], [0], [0], [0, 0, 1, 0], [], []>} : vector<1x32xf32>, vector<8x32xf32>, vector<1x8xf32> -> vector<1x8xf32>
    %20 = vector.broadcast %4 : f32 to vector<1x8xf32>
    %21 = arith.addf %19, %20 : vector<1x8xf32>
    %c0_17 = arith.constant 0 : index
    %c1 = arith.constant 1 : index
    %c0_18 = arith.constant 0 : index
    %22 = vector.load %arg8[%c0_17, %c1, %c0_18] : memref<1x3x8xf32, #tpu.memory_space<vmem>>, vector<1x1x8xf32>
    %23 = vector.shape_cast %22 : vector<1x1x8xf32> to vector<1x8xf32>
    %24 = vector.shape_cast %21 : vector<1x8xf32> to vector<1x1x8xf32>
    tpu.vector_store %arg8[%c0_17, %c1, %c0_18], %24 {strides = array<i32>} : memref<1x3x8xf32, #tpu.memory_space<vmem>>, vector<1x1x8xf32>,
    %c0_19 = arith.constant 0 : index
    %c0_20 = arith.constant 0 : index
    %c0_21 = arith.constant 0 : index
    %25 = vector.load %arg5[%c0_19, %c0_20, %c0_21] : memref<1x8x32xf32, #tpu.memory_space<vmem>>, vector<1x8x32xf32>
    %26 = vector.shape_cast %25 : vector<1x8x32xf32> to vector<8x32xf32>
    %cst_22 = arith.constant dense<0.000000e+00> : vector<1x8xf32>
    %27 = tpu.matmul %3, %26, %cst_22 {dimension_numbers = #tpu.dot_dimension_numbers<[1], [1], [0], [0], [0, 0, 1, 0], [], []>} : vector<1x32xf32>, vector<8x32xf32>, vector<1x8xf32> -> vector<1x8xf32>
    %28 = vector.broadcast %4 : f32 to vector<1x8xf32>
    %29 = arith.addf %27, %28 : vector<1x8xf32>
    %c0_23 = arith.constant 0 : index
    %c2 = arith.constant 2 : index
    %c0_24 = arith.constant 0 : index
    %30 = vector.load %arg8[%c0_23, %c2, %c0_24] : memref<1x3x8xf32, #tpu.memory_space<vmem>>, vector<1x1x8xf32>
    %31 = vector.shape_cast %30 : vector<1x1x8xf32> to vector<1x8xf32>
    %32 = vector.shape_cast %29 : vector<1x8xf32> to vector<1x1x8xf32>
    tpu.vector_store %arg8[%c0_23, %c2, %c0_24], %32 {strides = array<i32>} : memref<1x3x8xf32, #tpu.memory_space<vmem>>, vector<1x1x8xf32>,
    return
  }
  func.func @transform_0(%arg0: i32, %arg1: i32) -> (i32, i32, i32) {
    %c0_i32 = arith.constant 0 : i32
    %c0_i32_0 = arith.constant 0 : i32
    %c0_i32_1 = arith.constant 0 : i32
    return %arg0, %c0_i32, %c0_i32_0 : i32, i32, i32
  }
  func.func @transform_1(%arg0: i32, %arg1: i32) -> (i32, i32, i32) {
    %c0_i32 = arith.constant 0 : i32
    %c0_i32_0 = arith.constant 0 : i32
    %c0_i32_1 = arith.constant 0 : i32
    return %arg0, %c0_i32, %c0_i32_0 : i32, i32, i32
  }
  func.func @transform_2(%arg0: i32, %arg1: i32) -> (i32, i32, i32) {
    %c0_i32 = arith.constant 0 : i32
    %c0_i32_0 = arith.constant 0 : i32
    return %arg0, %arg1, %c0_i32 : i32, i32, i32
  }
  func.func @transform_3(%arg0: i32, %arg1: i32) -> (i32, i32, i32) {
    %c0_i32 = arith.constant 0 : i32
    %c0_i32_0 = arith.constant 0 : i32
    return %arg0, %arg1, %c0_i32 : i32, i32, i32
  }
  func.func @transform_4(%arg0: i32, %arg1: i32) -> (i32, i32) {
    %c0_i32 = arith.constant 0 : i32
    %c0_i32_0 = arith.constant 0 : i32
    %c0_i32_1 = arith.constant 0 : i32
    return %c0_i32, %c0_i32_0 : i32, i32
  }
  func.func @transform_5(%arg0: i32, %arg1: i32) -> (i32, i32) {
    %c0_i32 = arith.constant 0 : i32
    %c0_i32_0 = arith.constant 0 : i32
    %c0_i32_1 = arith.constant 0 : i32
    return %c0_i32, %c0_i32_0 : i32, i32
  }
  func.func @transform_6(%arg0: i32, %arg1: i32) -> (i32, i32, i32) {
    %c0_i32 = arith.constant 0 : i32
    %c0_i32_0 = arith.constant 0 : i32
    return %arg0, %c0_i32, %arg1 : i32, i32, i32
  }
}

</mosaic_0001>

<llo_original>
// kernel: discriminator_forward.1
$region0: #{discriminator_forward.1}
  #allocation0 [shape = 'u32[]', space=smem, size = 0x4, offset = 0x4, fixed_abs, tag = 'smem constant byte address 0x4 - core index']
  #allocation1 [shape = 'u32[72,128]{1,0:T(1,128)}', space=vmem, size = 0x9000, scoped, tag = 'internal scratch']
  #allocation2 [shape = 'f32[1,1]{1,0:T(1,128)S(6)}', space=smem, size = 0x200, scoped, tag = 'scoped memory for discriminator_forward.1']
  %s0 = inlined_call_operand.vmem [shape: f32[2,1,32], index: 0, kind: input, shape index: {}]
  %s1 = inlined_call_operand.vmem [shape: f32[2,1,32], index: 1, kind: input, shape index: {}]
  %s2 = inlined_call_operand.vmem [shape: f32[2,8,32], index: 2, kind: input, shape index: {}]
  %s3 = inlined_call_operand.vmem [shape: f32[2,8,32], index: 3, kind: input, shape index: {}]
  %s4 = inlined_call_operand.vmem [shape: f32[32,32], index: 4, kind: input, shape index: {}]
  %s5 = inlined_call_operand.<no memory space> [shape: f32[1,1], index: 5, kind: input, shape index: {}]
  %s6 = inlined_call_operand.vmem [shape: f32[2,3,8], index: 6, kind: output, shape index: {}]
  %s7 = sld [smem:[#allocation0]]
  $region57: #{discriminator_forward.1} parent=0
    _
  %s9 = ssub.s32 1, %s7
  %s10 = scalar_select 0, %s9, %s7
  %11 = sst [smem:[#allocation2]] %s5
  loop: start=0, step=1, limit=4
  $region2: #{discriminator_forward.1} parent=0 // loop_pre_header
    _
  $region3: #{discriminator_forward.1} parent=0 // loop_header
    %s13 = sphi 0, %s17
    %p14 = scmp.ge.s32.totalorder %s13, 4
    %s20 = sphi 0, %s32
    %s21 = sphi 0, %s28
    %s22 = sphi 0, %s20
    %s23 = sphi 0, %s21
    %s24 = sphi 0, %s22
    %s25 = sphi 0, %s23
    %s35 = sphi 0, %s37
    %s38 = sphi 0, %s35
    %s39 = sphi 0, %s38
    %s55 = sphi 0, %s39
    %s61 = sphi 0, %s63
    %s64 = sphi 0, %s61
    %s65 = sphi 0, %s64
    %s81 = sphi 0, %s65
    %s89 = sphi 0, %s91
    %s92 = sphi 0, %s89
    %s93 = sphi 0, %s92
    %s109 = sphi 0, %s93
    %s117 = sphi 0, %s119
    %s120 = sphi 0, %s117
    %s121 = sphi 0, %s120
    %s137 = sphi 0, %s121
    %s141 = sphi 0, %s141
    %s143 = sphi 0, %s141
    %s144 = sphi 0, %s143
    %s158 = sphi 0, %s144
    %s162 = sphi 0, %s162
    %s164 = sphi 0, %s162
    %s165 = sphi 0, %s164
    %s179 = sphi 0, %s165
    %s187 = sphi 0, %s189
    %s190 = sphi 0, %s187
    %s191 = sphi 0, %s190
    %s207 = sphi 0, %s191
  $region4: #{discriminator_forward.1} parent=0 // loop_header_branch
    %16 = sbr.rel (%p14) target = $region8
  $region5: #{discriminator_forward.1} parent=0 // loop_body
    %s18 = ssub.s32 %s13, 1
    %s19 = ssub.s32 %s13, 2
    %s26 = sadd.s32 1, %s21
    %p27 = scmp.ge.s32.totalorder %s26, 1
    %s28 = scalar_select %p27, 0, %s26
    %s29 = sadd.s32 1, %s20
    %s30 = scalar_select %p27, %s29, %s20
    %p31 = scmp.ge.s32.totalorder %s30, 2
    %s32 = scalar_select %p31, 0, %s30
    %s33 = ssub.s32 %s20, %s32
    %p34 = scmp.eq.s32.totalorder %s33, 0
    %s36 = sadd.s32 %s35, 1
    %s37 = scalar_select %p34, %s35, %s36
    %p40 = pneg %p34
    %p41 = scmp.eq.s32.totalorder %s13, 1
    %p42 = por %p40, %p41
    %p43 = scmp.ne.s32.totalorder %s35, %s38
    %p44 = scmp.eq.s32.totalorder %s13, 0
    %p45 = por %p43, %p44
    %p46 = scmp.ne.s32.totalorder %s35, %s38
    %p47 = scmp.eq.s32.totalorder %s18, 1
    %p48 = por %p46, %p47
    %p49 = scmp.ne.s32.totalorder %s38, %s39
    %p50 = scmp.eq.s32.totalorder %s18, 0
    %p51 = por %p49, %p50
    %p52 = scmp.ne.s32.totalorder %s38, %s39
    %p53 = scmp.eq.s32.totalorder %s19, 1
    %p54 = por %p52, %p53
    %p56 = scmp.ne.s32.totalorder %s39, %s55
    %p57 = scmp.eq.s32.totalorder %s19, 0
    %p58 = por %p56, %p57
    %s59 = ssub.s32 %s20, %s32
    %p60 = scmp.eq.s32.totalorder %s59, 0
    %s62 = sadd.s32 %s61, 1
    %s63 = scalar_select %p60, %s61, %s62
    %p66 = pneg %p60
    %p67 = scmp.eq.s32.totalorder %s13, 1
    %p68 = por %p66, %p67
    %p69 = scmp.ne.s32.totalorder %s61, %s64
    %p70 = scmp.eq.s32.totalorder %s13, 0
    %p71 = por %p69, %p70
    %p72 = scmp.ne.s32.totalorder %s61, %s64
    %p73 = scmp.eq.s32.totalorder %s18, 1
    %p74 = por %p72, %p73
    %p75 = scmp.ne.s32.totalorder %s64, %s65
    %p76 = scmp.eq.s32.totalorder %s18, 0
    %p77 = por %p75, %p76
    %p78 = scmp.ne.s32.totalorder %s64, %s65
    %p79 = scmp.eq.s32.totalorder %s19, 1
    %p80 = por %p78, %p79
    %p82 = scmp.ne.s32.totalorder %s65, %s81
    %p83 = scmp.eq.s32.totalorder %s19, 0
    %p84 = por %p82, %p83
    %s85 = ssub.s32 %s20, %s32
    %s86 = ssub.s32 %s21, %s28
    %s87 = sor.u32 %s85, %s86
    %p88 = scmp.eq.s32.totalorder %s87, 0
    %s90 = sadd.s32 %s89, 1
    %s91 = scalar_select %p88, %s89, %s90
    %p94 = pneg %p88
    %p95 = scmp.eq.s32.totalorder %s13, 1
    %p96 = por %p94, %p95
    %p97 = scmp.ne.s32.totalorder %s89, %s92
    %p98 = scmp.eq.s32.totalorder %s13, 0
    %p99 = por %p97, %p98
    %p100 = scmp.ne.s32.totalorder %s89, %s92
    %p101 = scmp.eq.s32.totalorder %s18, 1
    %p102 = por %p100, %p101
    %p103 = scmp.ne.s32.totalorder %s92, %s93
    %p104 = scmp.eq.s32.totalorder %s18, 0
    %p105 = por %p103, %p104
    %p106 = scmp.ne.s32.totalorder %s92, %s93
    %p107 = scmp.eq.s32.totalorder %s19, 1
    %p108 = por %p106, %p107
    %p110 = scmp.ne.s32.totalorder %s93, %s109
    %p111 = scmp.eq.s32.totalorder %s19, 0
    %p112 = por %p110, %p111
    %s113 = ssub.s32 %s20, %s32
    %s114 = ssub.s32 %s21, %s28
    %s115 = sor.u32 %s113, %s114
    %p116 = scmp.eq.s32.totalorder %s115, 0
    %s118 = sadd.s32 %s117, 1
    %s119 = scalar_select %p116, %s117, %s118
    %p122 = pneg %p116
    %p123 = scmp.eq.s32.totalorder %s13, 1
    %p124 = por %p122, %p123
    %p125 = scmp.ne.s32.totalorder %s117, %s120
    %p126 = scmp.eq.s32.totalorder %s13, 0
    %p127 = por %p125, %p126
    %p128 = scmp.ne.s32.totalorder %s117, %s120
    %p129 = scmp.eq.s32.totalorder %s18, 1
    %p130 = por %p128, %p129
    %p131 = scmp.ne.s32.totalorder %s120, %s121
    %p132 = scmp.eq.s32.totalorder %s18, 0
    %p133 = por %p131, %p132
    %p134 = scmp.ne.s32.totalorder %s120, %s121
    %p135 = scmp.eq.s32.totalorder %s19, 1
    %p136 = por %p134, %p135
    %p138 = scmp.ne.s32.totalorder %s121, %s137
    %p139 = scmp.eq.s32.totalorder %s19, 0
    %p140 = por %p138, %p139
    %s142 = sadd.s32 %s141, 1
    %p145 = scmp.eq.s32.totalorder %s13, 1
    %p146 = scmp.ne.s32.totalorder %s141, %s143
    %p147 = scmp.eq.s32.totalorder %s13, 0
    %p148 = por %p146, %p147
    %p149 = scmp.ne.s32.totalorder %s141, %s143
    %p150 = scmp.eq.s32.totalorder %s18, 1
    %p151 = por %p149, %p150
    %p152 = scmp.ne.s32.totalorder %s143, %s144
    %p153 = scmp.eq.s32.totalorder %s18, 0
    %p154 = por %p152, %p153
    %p155 = scmp.ne.s32.totalorder %s143, %s144
    %p156 = scmp.eq.s32.totalorder %s19, 1
    %p157 = por %p155, %p156
    %p159 = scmp.ne.s32.totalorder %s144, %s158
    %p160 = scmp.eq.s32.totalorder %s19, 0
    %p161 = por %p159, %p160
    %s163 = sadd.s32 %s162, 1
    %p166 = scmp.eq.s32.totalorder %s13, 1
    %p167 = scmp.ne.s32.totalorder %s162, %s164
    %p168 = scmp.eq.s32.totalorder %s13, 0
    %p169 = por %p167, %p168
    %p170 = scmp.ne.s32.totalorder %s162, %s164
    %p171 = scmp.eq.s32.totalorder %s18, 1
    %p172 = por %p170, %p171
    %p173 = scmp.ne.s32.totalorder %s164, %s165
    %p174 = scmp.eq.s32.totalorder %s18, 0
    %p175 = por %p173, %p174
    %p176 = scmp.ne.s32.totalorder %s164, %s165
    %p177 = scmp.eq.s32.totalorder %s19, 1
    %p178 = por %p176, %p177
    %p180 = scmp.ne.s32.totalorder %s165, %s179
    %p181 = scmp.eq.s32.totalorder %s19, 0
    %p182 = por %p180, %p181
    %s183 = ssub.s32 %s20, %s32
    %s184 = ssub.s32 %s21, %s28
    %s185 = sor.u32 %s183, %s184
    %p186 = scmp.eq.s32.totalorder %s185, 0
    %s188 = sadd.s32 %s187, 1
    %s189 = scalar_select %p186, %s187, %s188
    %p192 = pneg %p186
    %p193 = scmp.eq.s32.totalorder %s13, 1
    %p194 = por %p192, %p193
    %p195 = scmp.ne.s32.totalorder %s187, %s190
    %p196 = scmp.eq.s32.totalorder %s13, 0
    %p197 = por %p195, %p196
    %p198 = scmp.ne.s32.totalorder %s187, %s190
    %p199 = scmp.eq.s32.totalorder %s18, 1
    %p200 = por %p198, %p199
    %p201 = scmp.ne.s32.totalorder %s190, %s191
    %p202 = scmp.eq.s32.totalorder %s18, 0
    %p203 = por %p201, %p202
    %p204 = scmp.ne.s32.totalorder %s190, %s191
    %p205 = scmp.eq.s32.totalorder %s19, 1
    %p206 = por %p204, %p205
    %p208 = scmp.ne.s32.totalorder %s191, %s207
    %p209 = scmp.eq.s32.totalorder %s19, 0
    %p210 = por %p208, %p209
    %p211 = scmp.le.s32.totalorder 1, %s13
    %p212 = scmp.lt.s32.totalorder %s13, 3
    %p213 = pnand %p211, %p212
    %p214 = pneg %p213
    // Predicated region
    $region9: #{discriminator_forward.1} parent=5 // pred_check
      _
    $region10: #{discriminator_forward.1} parent=5 // pred_check_branch
      %216 = sbr.rel (%p213) target = $region12
    $region11: #{discriminator_forward.1} parent=5 // pred_region
      %s217 = ssub.s32 %s13, 1
      // Predicated region
      $region13: #{discriminator_forward.1} parent=11 // pred_check
        %p218 = pneg %p154
      $region14: #{discriminator_forward.1} parent=11 // pred_check_branch
        %220 = sbr.rel (%p218) target = $region16
      $region15: #{discriminator_forward.1} parent=11 // pred_region
        _
      $region16: #{discriminator_forward.1} parent=11 // pred_fallthru
        _
      // Predicated region
      $region17: #{discriminator_forward.1} parent=11 // pred_check
        %p221 = pneg %p175
      $region18: #{discriminator_forward.1} parent=11 // pred_check_branch
        %223 = sbr.rel (%p221) target = $region20
      $region19: #{discriminator_forward.1} parent=11 // pred_region
        _
      $region20: #{discriminator_forward.1} parent=11 // pred_fallthru
        _
    $region12: #{discriminator_forward.1} parent=5 // pred_fallthru
      _
    %p224 = scmp.lt.s32.totalorder %s13, 2
    // Predicated region
    $region21: #{discriminator_forward.1} parent=5 // pred_check
      %p225 = pneg %p224
    $region22: #{discriminator_forward.1} parent=5 // pred_check_branch
      %227 = sbr.rel (%p225) target = $region24
    $region23: #{discriminator_forward.1} parent=5 // pred_region
      // Predicated region
      $region25: #{discriminator_forward.1} parent=23 // pred_check
        %p228 = pneg %p45
      $region26: #{discriminator_forward.1} parent=23 // pred_check_branch
        %230 = sbr.rel (%p228) target = $region28
      $region27: #{discriminator_forward.1} parent=23 // pred_region
        %p231 = scmp.lt.s32.totalorder %s20, 1
        %s232 = scalar_select %p231, %s20, 1
        %s233 = scalar_lea.vmem %s0, %s232
      $region28: #{discriminator_forward.1} parent=23 // pred_fallthru
        _
      // Predicated region
      $region29: #{discriminator_forward.1} parent=23 // pred_check
        %p234 = pneg %p71
      $region30: #{discriminator_forward.1} parent=23 // pred_check_branch
        %236 = sbr.rel (%p234) target = $region32
      $region31: #{discriminator_forward.1} parent=23 // pred_region
        %p237 = scmp.lt.s32.totalorder %s20, 1
        %s238 = scalar_select %p237, %s20, 1
        %s239 = scalar_lea.vmem %s1, %s238
      $region32: #{discriminator_forward.1} parent=23 // pred_fallthru
        _
      // Predicated region
      $region33: #{discriminator_forward.1} parent=23 // pred_check
        %p240 = pneg %p99
      $region34: #{discriminator_forward.1} parent=23 // pred_check_branch
        %242 = sbr.rel (%p240) target = $region36
      $region35: #{discriminator_forward.1} parent=23 // pred_region
        %p243 = scmp.lt.s32.totalorder %s20, 1
        %s244 = scalar_select %p243, %s20, 1
        %p245 = scmp.lt.s32.totalorder %s21, 0
        %s246 = scalar_select %p245, %s21, 0
        %s247 = sadd.s32 %s246, %s244
        %s248 = smul.addr %s247, 8
        %s249 = scalar_lea.vmem %s2, %s248
      $region36: #{discriminator_forward.1} parent=23 // pred_fallthru
        _
      // Predicated region
      $region37: #{discriminator_forward.1} parent=23 // pred_check
        %p250 = pneg %p127
      $region38: #{discriminator_forward.1} parent=23 // pred_check_branch
        %252 = sbr.rel (%p250) target = $region40
      $region39: #{discriminator_forward.1} parent=23 // pred_region
        %p253 = scmp.lt.s32.totalorder %s20, 1
        %s254 = scalar_select %p253, %s20, 1
        %p255 = scmp.lt.s32.totalorder %s21, 0
        %s256 = scalar_select %p255, %s21, 0
        %s257 = sadd.s32 %s256, %s254
        %s258 = smul.addr %s257, 8
        %s259 = scalar_lea.vmem %s3, %s258
      $region40: #{discriminator_forward.1} parent=23 // pred_fallthru
        _
    $region24: #{discriminator_forward.1} parent=5 // pred_fallthru
      _
    %p260 = scmp.le.s32.totalorder 1, %s13
    %p261 = scmp.lt.s32.totalorder %s13, 3
    %p262 = pnand %p260, %p261
    %p263 = pneg %p262
    // Predicated region
    $region41: #{discriminator_forward.1} parent=5 // pred_check
      _
    $region42: #{discriminator_forward.1} parent=5 // pred_check_branch
      %265 = sbr.rel (%p262) target = $region44
    $region43: #{discriminator_forward.1} parent=5 // pred_region
      %s266 = ssub.s32 %s13, 1
      %p267 = scmp.lt.s32.totalorder %s22, 1
      %s268 = scalar_select %p267, %s22, 1
      %s269 = scalar_lea.vmem %s0, %s268
      %p270 = pneg %p51
      %p271 = pneg %p48
      %p272 = scmp.lt.s32.totalorder %s22, 1
      %s273 = scalar_select %p272, %s22, 1
      %s274 = scalar_lea.vmem %s1, %s273
      %p275 = pneg %p77
      %p276 = pneg %p74
      %p277 = scmp.lt.s32.totalorder %s22, 1
      %s278 = scalar_select %p277, %s22, 1
      %p279 = scmp.lt.s32.totalorder %s23, 0
      %s280 = scalar_select %p279, %s23, 0
      %s281 = sadd.s32 %s280, %s278
      %s282 = smul.addr %s281, 8
      %s283 = scalar_lea.vmem %s2, %s282
      %p284 = pneg %p105
      %p285 = pneg %p102
      %p286 = scmp.lt.s32.totalorder %s22, 1
      %s287 = scalar_select %p286, %s22, 1
      %p288 = scmp.lt.s32.totalorder %s23, 0
      %s289 = scalar_select %p288, %s23, 0
      %s290 = sadd.s32 %s289, %s287
      %s291 = smul.addr %s290, 8
      %s292 = scalar_lea.vmem %s3, %s291
      %p293 = pneg %p133
      %p294 = pneg %p130
      %p295 = pneg %p154
      %p296 = pneg %p151
      %p297 = pneg %p175
      %p298 = pneg %p172
      %p299 = pneg %p203
      %p300 = pneg %p200
      %p301 = scmp.lt.s32.totalorder %s22, 1
      %s302 = scalar_select %p301, %s22, 1
      %p303 = scmp.lt.s32.totalorder %s23, 0
      %s304 = scalar_select %p303, %s23, 0
      %s305 = sadd.s32 %s304, %s302
      %s306 = smul.addr %s305, 4
      %s307 = scalar_lea.vmem %s6, %s306
      %p308 = scmp.lt.s32.totalorder %s22, 1
      %s309 = scalar_select %p308, %s22, 1
      %s310 = scalar_lea.vmem %s0, %s309
      %p311 = scmp.lt.s32.totalorder %s22, 1
      %s312 = scalar_select %p311, %s22, 1
      %s313 = scalar_lea.vmem %s1, %s312
      %p314 = scmp.lt.s32.totalorder %s22, 1
      %s315 = scalar_select %p314, %s22, 1
      %p316 = scmp.lt.s32.totalorder %s23, 0
      %s317 = scalar_select %p316, %s23, 0
      %s318 = sadd.s32 %s317, %s315
      %s319 = smul.addr %s318, 8
      %s320 = scalar_lea.vmem %s2, %s319
      %p321 = scmp.lt.s32.totalorder %s22, 1
      %s322 = scalar_select %p321, %s22, 1
      %p323 = scmp.lt.s32.totalorder %s23, 0
      %s324 = scalar_select %p323, %s23, 0
      %s325 = sadd.s32 %s324, %s322
      %s326 = smul.addr %s325, 8
      %s327 = scalar_lea.vmem %s3, %s326
      %p328 = scmp.lt.s32.totalorder %s22, 1
      %s329 = scalar_select %p328, %s22, 1
      %p330 = scmp.lt.s32.totalorder %s23, 0
      %s331 = scalar_select %p330, %s23, 0
      %s332 = sadd.s32 %s331, %s329
      %s333 = smul.addr %s332, 4
      %s334 = scalar_lea.vmem %s6, %s333
      %v335 = vld [vmem:[%s310] sm:$0x1]
      %v336 = vld [vmem:[%s4] sm:$0xff]
      %v337 = vld [vmem:[%s4 + $0x8] sm:$0xff]
      %v338 = vld [vmem:[%s4 + $0x10] sm:$0xff]
      %v339 = vld [vmem:[%s4 + $0x18] sm:$0xff]
      %vm340 = vcmask 261120
      %v342 = vsel %vm340, %v335, 0
      %344 = vmatpush.msra.mxu0 0.0
      %345 = vmatpush.msra.mxu0 0.0
      %346 = vmatpush.msra.mxu0 0.0
      %347 = vmatpush.msra.mxu0 0.0
      %348 = vmatpush.msra.mxu0 0.0
      %349 = vmatpush.msra.mxu0 0.0
      %350 = vmatpush.msra.mxu0 0.0
      %351 = vmatpush.msra.mxu0 0.0
      %352 = vmatpush.msra.mxu0 0.0
      %353 = vmatpush.msra.mxu0 0.0
      %354 = vmatpush.msra.mxu0 0.0
      %355 = vmatpush.msra.mxu0 0.0
      %356 = vmatpush.msra.mxu0 %v339
      %357 = vmatpush.msra.mxu0 %v338
      %358 = vmatpush.msra.mxu0 %v337
      %359 = vmatpush.msra.mxu0 %v336
      %360 = vmatmul.f32.gmra.mxu0 %v342
      %v361 = vpop.f32.mrf.mxu0
      %v362 = vadd.f32 0.0, %v361
      %363 = vdwg.mxu0
      %s364 = sld [smem:[#allocation2]]
      %v365 = vld [vmem:[%s313] sm:$0x1]
      %v366 = vmul.f32 %v365, %v362
      %vm367 = vcmask 253952
      %v368 = vsel %vm367, %v366, 0.0
      %369 = vadd.xlane.f32.xlu0 %v368
      %v370 = vpop.xlane.xlu0 %369
      %v371 = vstv %s364
      %v372 = vadd.f32 %v370, %v371
      %vm373 = vcmask 57344
      %374 = vst.msk [vmem:[%s334] sm:$0x1] %vm373, %v372
      %v375 = vld [vmem:[%s320] sm:$0xff]
      %v377 = vsel %vm340, %v362, 0
      %v380 = vsel %vm340, %v375, 0
      %382 = vmatpush.xpose.msra.mxu0 0.0
      %383 = vmatpush.xpose.msra.mxu0 0.0
      %384 = vmatpush.xpose.msra.mxu0 0.0
      %385 = vmatpush.xpose.msra.mxu0 0.0
      %386 = vmatpush.xpose.msra.mxu0 0.0
      %387 = vmatpush.xpose.msra.mxu0 0.0
      %388 = vmatpush.xpose.msra.mxu0 0.0
      %389 = vmatpush.xpose.msra.mxu0 0.0
      %390 = vmatpush.xpose.msra.mxu0 0.0
      %391 = vmatpush.xpose.msra.mxu0 0.0
      %392 = vmatpush.xpose.msra.mxu0 0.0
      %393 = vmatpush.xpose.msra.mxu0 0.0
      %394 = vmatpush.xpose.msra.mxu0 0.0
      %395 = vmatpush.xpose.msra.mxu0 0.0
      %396 = vmatpush.xpose.msra.mxu0 0.0
      %397 = vmatpush.xpose.msra.mxu0 %v380
      %398 = vmatmul.f32.gmra.mxu0 %v377
      %v399 = vpop.f32.mrf.mxu0
      %v400 = vadd.f32 %v371, %v399
      %401 = vdwg.mxu0
      %402 = vst.msk [vmem:[%s334 + $0x1] sm:$0x1] %vm373, %v400
      %v403 = vld [vmem:[%s327] sm:$0xff]
      %v405 = vsel %vm340, %v403, 0
      %407 = vmatpush.xpose.msra.mxu0 0.0
      %408 = vmatpush.xpose.msra.mxu0 0.0
      %409 = vmatpush.xpose.msra.mxu0 0.0
      %410 = vmatpush.xpose.msra.mxu0 0.0
      %411 = vmatpush.xpose.msra.mxu0 0.0
      %412 = vmatpush.xpose.msra.mxu0 0.0
      %413 = vmatpush.xpose.msra.mxu0 0.0
      %414 = vmatpush.xpose.msra.mxu0 0.0
      %415 = vmatpush.xpose.msra.mxu0 0.0
      %416 = vmatpush.xpose.msra.mxu0 0.0
      %417 = vmatpush.xpose.msra.mxu0 0.0
      %418 = vmatpush.xpose.msra.mxu0 0.0
      %419 = vmatpush.xpose.msra.mxu0 0.0
      %420 = vmatpush.xpose.msra.mxu0 0.0
      %421 = vmatpush.xpose.msra.mxu0 0.0
      %422 = vmatpush.xpose.msra.mxu0 %v405
      %423 = vmatmul.f32.gmra.mxu0 %v377
      %v424 = vpop.f32.mrf.mxu0
      %v425 = vadd.f32 %v371, %v424
      %426 = vdwg.mxu0
      %427 = vst.msk [vmem:[%s334 + $0x2] sm:$0x1] %vm373, %v425
      %p428 = scmp.lt.s32.totalorder %s22, 1
      %s429 = scalar_select %p428, %s22, 1
      %p430 = scmp.lt.s32.totalorder %s23, 0
      %s431 = scalar_select %p430, %s23, 0
      %s432 = sadd.s32 %s431, %s429
      %s433 = smul.addr %s432, 4
      %s434 = scalar_lea.vmem %s6, %s433
      // Predicated region
      $region45: #{discriminator_forward.1} parent=43 // pred_check
        %p435 = pneg %p200
      $region46: #{discriminator_forward.1} parent=43 // pred_check_branch
        %437 = sbr.rel (%p435) target = $region48
      $region47: #{discriminator_forward.1} parent=43 // pred_region
        _
      $region48: #{discriminator_forward.1} parent=43 // pred_fallthru
        _
    $region44: #{discriminator_forward.1} parent=5 // pred_fallthru
      _
    %p438 = scmp.le.s32.totalorder 2, %s13
    // Predicated region
    $region49: #{discriminator_forward.1} parent=5 // pred_check
      %p439 = pneg %p438
    $region50: #{discriminator_forward.1} parent=5 // pred_check_branch
      %441 = sbr.rel (%p439) target = $region52
    $region51: #{discriminator_forward.1} parent=5 // pred_region
      %s442 = ssub.s32 %s13, 2
      // Predicated region
      $region53: #{discriminator_forward.1} parent=51 // pred_check
        %p443 = pneg %p206
      $region54: #{discriminator_forward.1} parent=51 // pred_check_branch
        %445 = sbr.rel (%p443) target = $region56
      $region55: #{discriminator_forward.1} parent=51 // pred_region
        %p446 = scmp.lt.s32.totalorder %s24, 1
        %s447 = scalar_select %p446, %s24, 1
        %p448 = scmp.lt.s32.totalorder %s25, 0
        %s449 = scalar_select %p448, %s25, 0
        %s450 = sadd.s32 %s449, %s447
        %s451 = smul.addr %s450, 4
        %s452 = scalar_lea.vmem %s6, %s451
      $region56: #{discriminator_forward.1} parent=51 // pred_fallthru
        _
    $region52: #{discriminator_forward.1} parent=5 // pred_fallthru
      _
  $region6: #{discriminator_forward.1} parent=0 // loop_footer
    %s17 = sadd.s32 1, %s13
  $region7: #{discriminator_forward.1} parent=0 // loop_footer_branch
    %12 = sbr.rel target = $region3
  $region8: #{discriminator_forward.1} parent=0 // loop_exit
    _

</llo_original>
